<compile_context>
chip_gen: v6e
topology: v6e:2x2x1
jax: 0.10.0
libtpu: 0.0.40
codegen_flags: <defaults>
</compile_context>

<pallas_src>
import inspect

import jax
import jax.numpy as jnp
import numpy as np
from jax.experimental import pallas as pl
from jax.experimental.pallas import tpu as pltpu


def _round_up(x, m):
    return ((x + m - 1) // m) * m


# Feature-detect multi-buffering support so the script never fails to import/run
# on an older Pallas (it is only a latency hint, not a correctness requirement).
try:
    _HAS_BUFFERED = (hasattr(pl, "Buffered")
                     and "pipeline_mode" in inspect.signature(pl.BlockSpec).parameters)
except (TypeError, ValueError):  # pragma: no cover
    _HAS_BUFFERED = False


# ----------------------------- Pallas kernel --------------------------------
def _make_sep_rnn_kernel(Hp, compute_dtype):
    cd = compute_dtype

    def kernel(x_ref, h0_ref, w1_ref, wg_ref, w2_ref, b_ref, q_ref, h_ref):
        t = pl.program_id(1)

        # Load the carried hidden state into the resident output block at t == 0.
        @pl.when(t == 0)
        def _():
            h_ref[...] = h0_ref[...]

        n_pad = q_ref.shape[-1]
        b1 = b_ref[0:1, :Hp]            # fc1 bias (padded lanes zero)
        bi = b_ref[1:2, :3 * Hp]        # [b_ir+b_hr | b_iz+b_hz | b_in]  (128-lane slabs)
        bh = b_ref[2:3, :3 * Hp]        # [   0      |     0     | b_hn ]
        b2 = b_ref[3:4, :n_pad]         # fc2 bias (zero padded)

        x = x_ref[...]                  # [TB, in]
        h = h_ref[...]                  # [TB, Hp]  (padded lanes stay exactly 0)

        # fc1 + ReLU (f32 accumulation on the MXU).  astype is a no-op in f32 mode.
        a = jnp.dot(x.astype(cd), w1_ref[...],
                    preferred_element_type=jnp.float32) + b1
        a = jnp.maximum(a, 0.0)

        # Fused GRU gate matmuls: two lane-dense [TB, Hp] @ [Hp, 3*Hp] dots.
        gi = jnp.dot(a.astype(cd), wg_ref[0],
                     preferred_element_type=jnp.float32) + bi
        gh = jnp.dot(h.astype(cd), wg_ref[1],
                     preferred_element_type=jnp.float32) + bh

        # 128-aligned, unmasked gate slices (each gate is a full lane slab).
        r = jax.nn.sigmoid(gi[:, 0:Hp] + gh[:, 0:Hp])
        z = jax.nn.sigmoid(gi[:, Hp:2 * Hp] + gh[:, Hp:2 * Hp])
        n = jnp.tanh(gi[:, 2 * Hp:3 * Hp] + r * gh[:, 2 * Hp:3 * Hp])
        h_new = (1.0 - z) * n + z * h

        # fc2 (lane-dense, padded output).
        q = jnp.dot(h_new.astype(cd), w2_ref[...],
                    preferred_element_type=jnp.float32) + b2

        q_ref[...] = q
        h_ref[...] = h_new              # carried across t; HBM writeback once per tile

    return kernel


# ----------------------------- weight packing ---------------------------------
def _pack_params(params, Hp, n_pad, compute_dtype):
    """Pack PyTorch-layout params into lane-dense, 128-padded slabs."""
    H = params["w_hh"].shape[1]
    in_dim = params["w1"].shape[1]
    n_actions = params["w2"].shape[0]

    # fc1: [in, Hp], padded output columns are zero -> relu(x@w1)=0 in padded lanes.
    w1 = jnp.zeros((in_dim, Hp), jnp.float32).at[:, :H].set(params["w1"].T)

    def pad_gates(w):                   # w: [3H, H] (torch) -> [Hp, 3*Hp] (x @ W form)
        wt = w.T                        # [H, 3H], columns grouped [r | z | n]
        out = jnp.zeros((Hp, 3 * Hp), jnp.float32)
        for g in range(3):
            out = out.at[:H, g * Hp:g * Hp + H].set(wt[:, g * H:(g + 1) * H])
        return out

    wg = jnp.stack([pad_gates(params["w_ih"]), pad_gates(params["w_hh"])], axis=0)

    # fc2: [Hp, n_pad]; padded rows/cols zero.
    w2 = jnp.zeros((Hp, n_pad), jnp.float32).at[:H, :n_actions].set(params["w2"].T)

    # Bias slab [4, bw] (f32 always; added after the f32-accumulated dots).
    bw = max(3 * Hp, n_pad)
    b_ih, b_hh = params["b_ih"], params["b_hh"]
    bias = jnp.zeros((4, bw), jnp.float32)
    bias = bias.at[0, :H].set(params["b1"])
    for g in range(3):
        bg = b_ih[g * H:(g + 1) * H]
        if g < 2:                       # r/z biases can be pre-summed (summed pre-sigmoid)
            bg = bg + b_hh[g * H:(g + 1) * H]
        bias = bias.at[1, g * Hp:g * Hp + H].set(bg)
    bias = bias.at[2, 2 * Hp:2 * Hp + H].set(b_hh[2 * H:3 * H])   # b_hn stays inside r*(...)
    bias = bias.at[3, :n_actions].set(params["b2"])

    cd = compute_dtype
    return w1.astype(cd), wg.astype(cd), w2.astype(cd), bias


# ------------------------------- wrappers -------------------------------------
def sep_rnn_agent_rollout(inputs, hidden_state, params, *,
                          compute_dtype=jnp.float32, batch_tile=1024):
    """Fused T-step rollout.

    inputs:       [T, B, input_shape] (f32, or bf16 when compute_dtype=bf16)
    hidden_state: anything reshapeable to [B, H] (or [1, H], broadcast over B)
    returns:      q [T, B, n_actions] f32,  h_out [B, H] f32
    """
    inputs = jnp.asarray(inputs)
    H = params["w_hh"].shape[1]
    n_actions = params["w2"].shape[0]
    T, B, in_dim = inputs.shape

    Hp = _round_up(H, 128)              # 128-lane hidden slab
    n_pad = _round_up(n_actions, 128)   # lane-dense q output

    h0 = jnp.asarray(hidden_state, jnp.float32).reshape(-1, H)
    if h0.shape[0] == 1 and B > 1:
        h0 = jnp.broadcast_to(h0, (B, H))
    h0p = jnp.zeros((B, Hp), jnp.float32).at[:, :H].set(h0)   # padded lanes start at 0

    w1, wg, w2, bias = _pack_params(params, Hp, n_pad, compute_dtype)
    bw = bias.shape[1]

    # Batch tile: big blocks (per-grid-step overhead amortization), but keep >= 2
    # batch tiles when B is large enough so v7x's second TensorCore gets work.
    if B <= 16:
        tb = B
    else:
        tb = min(_round_up(batch_tile, 8), _round_up(pl.cdiv(B, 2), 8))
    grid = (pl.cdiv(B, tb), T)          # T innermost ("arbitrary"): h carried across it

    x_map = lambda i, t: (t, i, 0)
    if _HAS_BUFFERED and T >= 3:
        x_spec = pl.BlockSpec((None, tb, in_dim), x_map, pipeline_mode=pl.Buffered(3))
    else:
        x_spec = pl.BlockSpec((None, tb, in_dim), x_map)

    kernel = _make_sep_rnn_kernel(Hp, compute_dtype)

    q_pad, h_out_pad = pl.pallas_call(
        kernel,
        grid=grid,
        in_specs=[
            x_spec,                                                 # inputs (streamed per t)
            pl.BlockSpec((tb, Hp), lambda i, t: (i, 0)),            # h_in (read at t == 0)
            pl.BlockSpec((in_dim, Hp), lambda i, t: (0, 0)),        # w1 (resident)
            pl.BlockSpec((2, Hp, 3 * Hp), lambda i, t: (0, 0, 0)),  # stacked gate weights
            pl.BlockSpec((Hp, n_pad), lambda i, t: (0, 0)),         # w2 (padded, resident)
            pl.BlockSpec((4, bw), lambda i, t: (0, 0)),             # bias slab (resident)
        ],
        out_specs=(
            pl.BlockSpec((None, tb, n_pad), lambda i, t: (t, i, 0)),  # q (lane-dense)
            pl.BlockSpec((tb, Hp), lambda i, t: (i, 0)),              # h carry / final state
        ),
        out_shape=(jax.ShapeDtypeStruct((T, B, n_pad), jnp.float32),
                   jax.ShapeDtypeStruct((B, Hp), jnp.float32)),
        input_output_aliases={1: 1},                                  # reuse h_in buffer
        compiler_params=pltpu.CompilerParams(
            dimension_semantics=("parallel", "arbitrary")),
    )(inputs, h0p, w1, wg, w2, bias)

    return q_pad[..., :n_actions], h_out_pad[:, :H]


def sep_rnn_agent_forward(inputs, hidden_state, params, **kwargs):
    """Single step, matching SepRNNAgent.forward: [B, in] -> (q [B, n_actions], h [B, H])."""
    q, h = sep_rnn_agent_rollout(inputs[None, ...], hidden_state, params, **kwargs)
    return q[0], h


# --------------------------- pure-JAX reference ------------------------------
def reference_forward(inputs, hidden_state, params):
    H = params["w_hh"].shape[1]
    h = jnp.asarray(hidden_state, jnp.float32).reshape(-1, H)
    a = jax.nn.relu(inputs @ params["w1"].T + params["b1"])
    gi = a @ params["w_ih"].T + params["b_ih"]
    gh = h @ params["w_hh"].T + params["b_hh"]
    i_r, i_z, i_n = gi[:, :H], gi[:, H:2 * H], gi[:, 2 * H:]
    h_r, h_z, h_n = gh[:, :H], gh[:, H:2 * H], gh[:, 2 * H:]
    r = jax.nn.sigmoid(i_r + h_r)
    z = jax.nn.sigmoid(i_z + h_z)
    n = jnp.tanh(i_n + r * h_n)
    h_new = (1.0 - z) * n + z * h
    q = h_new @ params["w2"].T + params["b2"]
    return q, h_new


def reference_rollout(inputs_seq, hidden_state, params):
    h = hidden_state
    qs = []
    for t in range(inputs_seq.shape[0]):
        q, h = reference_forward(inputs_seq[t], h, params)
        qs.append(q)
    return jnp.stack(qs, axis=0), h


# -------------------------- deterministic init -------------------------------
def init_params(key, input_shape, hidden, n_actions):
    ks = jax.random.split(key, 8)

    def xavier(k, shape):  # mimics torch.nn.init.xavier_uniform_
        fan_out, fan_in = shape
        bound = float(np.sqrt(6.0 / (fan_in + fan_out)))
        return jax.random.uniform(k, shape, jnp.float32, -bound, bound)

    def torch_uniform(k, shape, fan_in):
        bound = 1.0 / float(np.sqrt(fan_in))
        return jax.random.uniform(k, shape, jnp.float32, -bound, bound)

    return {
        "w1": xavier(ks[0], (hidden, input_shape)),
        "b1": torch_uniform(ks[1], (hidden,), input_shape),
        "w_ih": torch_uniform(ks[2], (3 * hidden, hidden), hidden),
        "w_hh": torch_uniform(ks[3], (3 * hidden, hidden), hidden),
        "b_ih": torch_uniform(ks[4], (3 * hidden,), hidden),
        "b_hh": torch_uniform(ks[5], (3 * hidden,), hidden),
        "w2": xavier(ks[6], (n_actions, hidden)),
        "b2": torch_uniform(ks[7], (n_actions,), hidden),
    }


if __name__ == "__main__":
    B, INPUT_SHAPE, HIDDEN, N_ACTIONS, T = 4, 32, 64, 10, 6

    key = jax.random.PRNGKey(0)
    k_in, k_seq, k_h, k_p = jax.random.split(key, 4)
    inputs = jax.random.normal(k_in, (B, INPUT_SHAPE), jnp.float32)
    inputs_seq = jax.random.normal(k_seq, (T, B, INPUT_SHAPE), jnp.float32)
    hidden_state = jax.random.normal(k_h, (B, HIDDEN), jnp.float32)
    params = init_params(k_p, INPUT_SHAPE, HIDDEN, N_ACTIONS)

    # --- single step (bit-faithful to the PyTorch module forward, f32 path) ---
    q_ref, h_ref = reference_forward(inputs, hidden_state, params)
    q, h_out = sep_rnn_agent_forward(inputs, hidden_state, params)
    jax.block_until_ready((q, h_out))
    np.testing.assert_allclose(np.asarray(q), np.asarray(q_ref), rtol=1e-5, atol=1e-5)
    np.testing.assert_allclose(np.asarray(h_out), np.asarray(h_ref), rtol=1e-5, atol=1e-5)

    # --- fused T-step rollout (T folded into the kernel grid; the big perf win) ---
    qs_ref, hT_ref = reference_rollout(inputs_seq, hidden_state, params)
    qs, hT = sep_rnn_agent_rollout(inputs_seq, hidden_state, params)
    jax.block_until_ready((qs, hT))
    np.testing.assert_allclose(np.asarray(qs), np.asarray(qs_ref), rtol=1e-4, atol=1e-4)
    np.testing.assert_allclose(np.asarray(hT), np.asarray(hT_ref), rtol=1e-4, atol=1e-4)

    # --- optional bf16-operand path (opt-in; f32 stays the default per v5e guidance) ---
    q_bf, h_bf = sep_rnn_agent_forward(inputs, hidden_state, params,
                                       compute_dtype=jnp.bfloat16)
    jax.block_until_ready((q_bf, h_bf))
    np.testing.assert_allclose(np.asarray(q_bf), np.asarray(q_ref), rtol=5e-2, atol=5e-2)
    np.testing.assert_allclose(np.asarray(h_bf), np.asarray(h_ref), rtol=5e-2, atol=5e-2)

    print("KERNEL_OK")
</pallas_src>

<mosaic_0001>
module attributes {stable_mosaic.version = 11 : i64} {
  func.func @kernel(%arg0: i32, %arg1: i32, %arg2: memref<1x4x32xf32, #tpu.memory_space<vmem>>, %arg3: memref<4x128xf32, #tpu.memory_space<vmem>>, %arg4: memref<32x128xf32, #tpu.memory_space<vmem>>, %arg5: memref<2x128x384xf32, #tpu.memory_space<vmem>>, %arg6: memref<128x128xf32, #tpu.memory_space<vmem>>, %arg7: memref<4x384xf32, #tpu.memory_space<vmem>>, %arg8: memref<1x4x128xf32, #tpu.memory_space<vmem>>, %arg9: memref<4x128xf32, #tpu.memory_space<vmem>>) attributes {dimension_semantics = [#tpu.dimension_semantics<parallel>, #tpu.dimension_semantics<arbitrary>], iteration_bounds = array<i64: 1, 1>, scalar_prefetch = 0 : i64, scratch_operands = 0 : i64, tpu.core_type = #tpu.core_type<tc>, window_params = [{transform_indices = @transform_0, window_bounds = array<i64: 1, 4, 32>}, {transform_indices = @transform_1, window_bounds = array<i64: 4, 128>}, {pipeline_mode = #tpu.pipeline_mode<synchronous>, transform_indices = @transform_2, window_bounds = array<i64: 32, 128>}, {pipeline_mode = #tpu.pipeline_mode<synchronous>, transform_indices = @transform_3, window_bounds = array<i64: 2, 128, 384>}, {pipeline_mode = #tpu.pipeline_mode<synchronous>, transform_indices = @transform_4, window_bounds = array<i64: 128, 128>}, {pipeline_mode = #tpu.pipeline_mode<synchronous>, transform_indices = @transform_5, window_bounds = array<i64: 4, 384>}, {transform_indices = @transform_6, window_bounds = array<i64: 1, 4, 128>}, {transform_indices = @transform_7, window_bounds = array<i64: 4, 128>}]} {
    %c0_i32 = arith.constant 0 : i32
    %0 = arith.cmpi eq, %arg1, %c0_i32 : i32
    %1 = arith.extui %0 : i1 to i32
    %c0_i32_0 = arith.constant 0 : i32
    %2 = arith.cmpi ne, %1, %c0_i32_0 : i32
    scf.if %2 {
      %c0_32 = arith.constant 0 : index
      %c0_33 = arith.constant 0 : index
      %60 = vector.load %arg3[%c0_32, %c0_33] : memref<4x128xf32, #tpu.memory_space<vmem>>, vector<4x128xf32>
      %c0_34 = arith.constant 0 : index
      %c0_35 = arith.constant 0 : index
      %61 = vector.load %arg9[%c0_34, %c0_35] : memref<4x128xf32, #tpu.memory_space<vmem>>, vector<4x128xf32>
      tpu.vector_store %arg9[%c0_34, %c0_35], %60 {strides = array<i32>} : memref<4x128xf32, #tpu.memory_space<vmem>>, vector<4x128xf32>,
    } else {
    }
    %c0 = arith.constant 0 : index
    %c0_1 = arith.constant 0 : index
    %3 = vector.load %arg7[%c0, %c0_1] : memref<4x384xf32, #tpu.memory_space<vmem>>, vector<1x128xf32>
    %c1 = arith.constant 1 : index
    %c0_2 = arith.constant 0 : index
    %4 = vector.load %arg7[%c1, %c0_2] : memref<4x384xf32, #tpu.memory_space<vmem>>, vector<1x384xf32>
    %c2 = arith.constant 2 : index
    %c0_3 = arith.constant 0 : index
    %5 = vector.load %arg7[%c2, %c0_3] : memref<4x384xf32, #tpu.memory_space<vmem>>, vector<1x384xf32>
    %c3 = arith.constant 3 : index
    %c0_4 = arith.constant 0 : index
    %6 = vector.load %arg7[%c3, %c0_4] : memref<4x384xf32, #tpu.memory_space<vmem>>, vector<1x128xf32>
    %c0_5 = arith.constant 0 : index
    %c0_6 = arith.constant 0 : index
    %c0_7 = arith.constant 0 : index
    %7 = vector.load %arg2[%c0_5, %c0_6, %c0_7] : memref<1x4x32xf32, #tpu.memory_space<vmem>>, vector<1x4x32xf32>
    %8 = vector.shape_cast %7 : vector<1x4x32xf32> to vector<4x32xf32>
    %c0_8 = arith.constant 0 : index
    %c0_9 = arith.constant 0 : index
    %9 = vector.load %arg9[%c0_8, %c0_9] : memref<4x128xf32, #tpu.memory_space<vmem>>, vector<4x128xf32>
    %c0_10 = arith.constant 0 : index
    %c0_11 = arith.constant 0 : index
    %10 = vector.load %arg4[%c0_10, %c0_11] : memref<32x128xf32, #tpu.memory_space<vmem>>, vector<32x128xf32>
    %cst = arith.constant dense<0.000000e+00> : vector<4x128xf32>
    %11 = tpu.matmul %8, %10, %cst {dimension_numbers = #tpu.dot_dimension_numbers<[1], [0], [0], [1], [0, 0, 1, 1], [], []>} : vector<4x32xf32>, vector<32x128xf32>, vector<4x128xf32> -> vector<4x128xf32>
    %12 = vector.broadcast %3 : vector<1x128xf32> to vector<4x128xf32>
    %13 = arith.addf %11, %12 : vector<4x128xf32>
    %cst_12 = arith.constant 0.000000e+00 : f32
    %14 = vector.broadcast %cst_12 : f32 to vector<4x128xf32>
    %15 = arith.maximumf %13, %14 : vector<4x128xf32>
    %c0_13 = arith.constant 0 : index
    %c0_14 = arith.constant 0 : index
    %c0_15 = arith.constant 0 : index
    %16 = vector.load %arg5[%c0_13, %c0_14, %c0_15] : memref<2x128x384xf32, #tpu.memory_space<vmem>>, vector<1x128x384xf32>
    %17 = vector.shape_cast %16 : vector<1x128x384xf32> to vector<128x384xf32>
    %cst_16 = arith.constant dense<0.000000e+00> : vector<4x384xf32>
    %18 = tpu.matmul %15, %17, %cst_16 {dimension_numbers = #tpu.dot_dimension_numbers<[1], [0], [0], [1], [0, 0, 1, 1], [], []>} : vector<4x128xf32>, vector<128x384xf32>, vector<4x384xf32> -> vector<4x384xf32>
    %19 = vector.broadcast %4 : vector<1x384xf32> to vector<4x384xf32>
    %20 = arith.addf %18, %19 : vector<4x384xf32>
    %c1_17 = arith.constant 1 : index
    %c0_18 = arith.constant 0 : index
    %c0_19 = arith.constant 0 : index
    %21 = vector.load %arg5[%c1_17, %c0_18, %c0_19] : memref<2x128x384xf32, #tpu.memory_space<vmem>>, vector<1x128x384xf32>
    %22 = vector.shape_cast %21 : vector<1x128x384xf32> to vector<128x384xf32>
    %cst_20 = arith.constant dense<0.000000e+00> : vector<4x384xf32>
    %23 = tpu.matmul %9, %22, %cst_20 {dimension_numbers = #tpu.dot_dimension_numbers<[1], [0], [0], [1], [0, 0, 1, 1], [], []>} : vector<4x128xf32>, vector<128x384xf32>, vector<4x384xf32> -> vector<4x384xf32>
    %24 = vector.broadcast %5 : vector<1x384xf32> to vector<4x384xf32>
    %25 = arith.addf %23, %24 : vector<4x384xf32>
    %26 = vector.extract_strided_slice %20 {offsets = [0, 0], sizes = [4, 128], strides = [1, 1]} : vector<4x384xf32> to vector<4x128xf32>
    %27 = vector.extract_strided_slice %25 {offsets = [0, 0], sizes = [4, 128], strides = [1, 1]} : vector<4x384xf32> to vector<4x128xf32>
    %28 = arith.addf %26, %27 : vector<4x128xf32>
    %29 = arith.negf %28 : vector<4x128xf32>
    %30 = math.exp %29 : vector<4x128xf32>
    %cst_21 = arith.constant 1.000000e+00 : f32
    %31 = vector.broadcast %cst_21 : f32 to vector<4x128xf32>
    %32 = arith.addf %31, %30 : vector<4x128xf32>
    %33 = arith.divf %31, %32 : vector<4x128xf32>
    %34 = vector.extract_strided_slice %20 {offsets = [0, 128], sizes = [4, 128], strides = [1, 1]} : vector<4x384xf32> to vector<4x128xf32>
    %35 = vector.extract_strided_slice %25 {offsets = [0, 128], sizes = [4, 128], strides = [1, 1]} : vector<4x384xf32> to vector<4x128xf32>
    %36 = arith.addf %34, %35 : vector<4x128xf32>
    %37 = arith.negf %36 : vector<4x128xf32>
    %38 = math.exp %37 : vector<4x128xf32>
    %cst_22 = arith.constant 1.000000e+00 : f32
    %39 = vector.broadcast %cst_22 : f32 to vector<4x128xf32>
    %40 = arith.addf %39, %38 : vector<4x128xf32>
    %41 = arith.divf %39, %40 : vector<4x128xf32>
    %42 = vector.extract_strided_slice %20 {offsets = [0, 256], sizes = [4, 128], strides = [1, 1]} : vector<4x384xf32> to vector<4x128xf32>
    %43 = vector.extract_strided_slice %25 {offsets = [0, 256], sizes = [4, 128], strides = [1, 1]} : vector<4x384xf32> to vector<4x128xf32>
    %44 = arith.mulf %33, %43 : vector<4x128xf32>
    %45 = arith.addf %42, %44 : vector<4x128xf32>
    %46 = math.tanh %45 : vector<4x128xf32>
    %cst_23 = arith.constant 1.000000e+00 : f32
    %47 = vector.broadcast %cst_23 : f32 to vector<4x128xf32>
    %48 = arith.subf %47, %41 : vector<4x128xf32>
    %49 = arith.mulf %48, %46 : vector<4x128xf32>
    %50 = arith.mulf %41, %9 : vector<4x128xf32>
    %51 = arith.addf %49, %50 : vector<4x128xf32>
    %c0_24 = arith.constant 0 : index
    %c0_25 = arith.constant 0 : index
    %52 = vector.load %arg6[%c0_24, %c0_25] : memref<128x128xf32, #tpu.memory_space<vmem>>, vector<128x128xf32>
    %cst_26 = arith.constant dense<0.000000e+00> : vector<4x128xf32>
    %53 = tpu.matmul %51, %52, %cst_26 {dimension_numbers = #tpu.dot_dimension_numbers<[1], [0], [0], [1], [0, 0, 1, 1], [], []>} : vector<4x128xf32>, vector<128x128xf32>, vector<4x128xf32> -> vector<4x128xf32>
    %54 = vector.broadcast %6 : vector<1x128xf32> to vector<4x128xf32>
    %55 = arith.addf %53, %54 : vector<4x128xf32>
    %c0_27 = arith.constant 0 : index
    %c0_28 = arith.constant 0 : index
    %c0_29 = arith.constant 0 : index
    %56 = vector.load %arg8[%c0_27, %c0_28, %c0_29] : memref<1x4x128xf32, #tpu.memory_space<vmem>>, vector<1x4x128xf32>
    %57 = vector.shape_cast %56 : vector<1x4x128xf32> to vector<4x128xf32>
    %58 = vector.shape_cast %55 : vector<4x128xf32> to vector<1x4x128xf32>
    tpu.vector_store %arg8[%c0_27, %c0_28, %c0_29], %58 {strides = array<i32>} : memref<1x4x128xf32, #tpu.memory_space<vmem>>, vector<1x4x128xf32>,
    %c0_30 = arith.constant 0 : index
    %c0_31 = arith.constant 0 : index
    %59 = vector.load %arg9[%c0_30, %c0_31] : memref<4x128xf32, #tpu.memory_space<vmem>>, vector<4x128xf32>
    tpu.vector_store %arg9[%c0_30, %c0_31], %51 {strides = array<i32>} : memref<4x128xf32, #tpu.memory_space<vmem>>, vector<4x128xf32>,
    return
  }
  func.func @transform_0(%arg0: i32, %arg1: i32) -> (i32, i32, i32) {
    %c0_i32 = arith.constant 0 : i32
    %c0_i32_0 = arith.constant 0 : i32
    return %arg1, %arg0, %c0_i32 : i32, i32, i32
  }
  func.func @transform_1(%arg0: i32, %arg1: i32) -> (i32, i32) {
    %c0_i32 = arith.constant 0 : i32
    %c0_i32_0 = arith.constant 0 : i32
    return %arg0, %c0_i32 : i32, i32
  }
  func.func @transform_2(%arg0: i32, %arg1: i32) -> (i32, i32) {
    %c0_i32 = arith.constant 0 : i32
    %c0_i32_0 = arith.constant 0 : i32
    %c0_i32_1 = arith.constant 0 : i32
    return %c0_i32, %c0_i32_0 : i32, i32
  }
  func.func @transform_3(%arg0: i32, %arg1: i32) -> (i32, i32, i32) {
    %c0_i32 = arith.constant 0 : i32
    %c0_i32_0 = arith.constant 0 : i32
    %c0_i32_1 = arith.constant 0 : i32
    %c0_i32_2 = arith.constant 0 : i32
    return %c0_i32, %c0_i32_0, %c0_i32_1 : i32, i32, i32
  }
  func.func @transform_4(%arg0: i32, %arg1: i32) -> (i32, i32) {
    %c0_i32 = arith.constant 0 : i32
    %c0_i32_0 = arith.constant 0 : i32
    %c0_i32_1 = arith.constant 0 : i32
    return %c0_i32, %c0_i32_0 : i32, i32
  }
  func.func @transform_5(%arg0: i32, %arg1: i32) -> (i32, i32) {
    %c0_i32 = arith.constant 0 : i32
    %c0_i32_0 = arith.constant 0 : i32
    %c0_i32_1 = arith.constant 0 : i32
    return %c0_i32, %c0_i32_0 : i32, i32
  }
  func.func @transform_6(%arg0: i32, %arg1: i32) -> (i32, i32, i32) {
    %c0_i32 = arith.constant 0 : i32
    %c0_i32_0 = arith.constant 0 : i32
    return %arg1, %arg0, %c0_i32 : i32, i32, i32
  }
  func.func @transform_7(%arg0: i32, %arg1: i32) -> (i32, i32) {
    %c0_i32 = arith.constant 0 : i32
    %c0_i32_0 = arith.constant 0 : i32
    return %arg0, %c0_i32 : i32, i32
  }
}

</mosaic_0001>

<llo_original>
// kernel: tpu_custom_call.1
$region0: #{tpu_custom_call.1}
  #allocation0 [shape = 'u32[]', space=smem, size = 0x4, offset = 0x4, fixed_abs, tag = 'smem constant byte address 0x4 - core index']
  #allocation1 [shape = 'u32[144,128]{1,0:T(1,128)}', space=vmem, size = 0x12000, scoped, tag = 'internal scratch']
  %s0 = inlined_call_operand.vmem [shape: f32[1,4,32], index: 0, kind: input, shape index: {}]
  %s1 = inlined_call_operand.hbm [shape: f32[4,128], index: 1, kind: input, shape index: {}, may-alias: {1,7}]
  %s2 = inlined_call_operand.hbm [shape: f32[32,128], index: 2, kind: input, shape index: {}]
  %s3 = inlined_call_operand.hbm [shape: f32[2,128,384], index: 3, kind: input, shape index: {}]
  %s4 = inlined_call_operand.hbm [shape: f32[128,128], index: 4, kind: input, shape index: {}]
  %s5 = inlined_call_operand.hbm [shape: f32[4,384], index: 5, kind: input, shape index: {}]
  %s6 = inlined_call_operand.hbm [shape: f32[1,4,128], index: 6, kind: output, shape index: {0}]
  %s7 = inlined_call_operand.hbm [shape: f32[4,128], index: 7, kind: output, shape index: {1}, may-alias: {1,7}]
  %8 = xla_tuple %s6, %s7
  %s9 = sld [smem:[#allocation0]]
  $region66: #{tpu_custom_call.1} parent=0
    _
  %s11 = ssub.s32 1, %s9
  %s12 = scalar_select 0, %s11, %s9
  $region1: #{tpu_custom_call.1} parent=0
    #allocation2 [shape = 'u8[2048]{0}', space=vmem, size = 0x800, scoped, tag = 'input window, operand 1, single buffered']
    #allocation3 [shape = 's32[1]{0}', space=sflag, size = 0x4, scoped, tag = 'scoped memory for tpu_custom_call.1']
    #allocation4 [shape = 's32[1]{0}', space=sflag, size = 0x4, scoped, tag = 'scoped memory for tpu_custom_call.1']
    #allocation5 [shape = 'u8[16384]{0}', space=vmem, size = 0x4000, scoped, tag = 'input window, operand 2, single buffered']
    #allocation6 [shape = 's32[1]{0}', space=sflag, size = 0x4, scoped, tag = 'scoped memory for tpu_custom_call.1']
    #allocation7 [shape = 'u8[393216]{0}', space=vmem, size = 0x60000, scoped, tag = 'input window, operand 3, single buffered']
    #allocation8 [shape = 'u8[65536]{0}', space=vmem, size = 0x10000, scoped, tag = 'input window, operand 4, single buffered']
    #allocation9 [shape = 's32[1]{0}', space=sflag, size = 0x4, scoped, tag = 'scoped memory for tpu_custom_call.1']
    #allocation10 [shape = 'u8[6144]{0}', space=vmem, size = 0x1800, scoped, tag = 'input window, operand 5, single buffered']
    #allocation11 [shape = 'u8[2048]{0}', space=vmem, size = 0x800, scoped, tag = 'output window, operand 0, single buffered']
    #allocation12 [shape = 'u8[2048]{0}', space=vmem, size = 0x800, scoped, tag = 'output window, operand 1, single buffered']
    #allocation13 [shape = 's32[1]{0}', space=sflag, size = 0x4, scoped, tag = 'scoped memory for tpu_custom_call.1']
    %13 = vsyncpa [#allocation3], 0
    %14 = vsyncpa [#allocation6], 0
    %15 = vsyncpa [#allocation9], 0
    %16 = vsyncpa [#allocation4], 0
    %17 = vsyncpa [#allocation13], 0
    // Predicated region
    $region2: #{tpu_custom_call.1} parent=1 // pred_check
      _
    $region3: #{tpu_custom_call.1} parent=1 // pred_check_branch
      %19 = sbr.rel (0) target = $region5
    $region4: #{tpu_custom_call.1} parent=1 // pred_region
      _
    $region5: #{tpu_custom_call.1} parent=1 // pred_fallthru
      _
    // Predicated region
    $region6: #{tpu_custom_call.1} parent=1 // pred_check
      _
    $region7: #{tpu_custom_call.1} parent=1 // pred_check_branch
      %21 = sbr.rel (0) target = $region9
    $region8: #{tpu_custom_call.1} parent=1 // pred_region
      %s23 = ssub.s32 64, 64
      %24 = vsyncadd [#allocation3], %s23
      %s26 = sshll.u32 [#allocation2], 4
      %s27 = int_to_ptr.vmem [resolvable:$true] %s26
      %29 = dma.hbm_to_vmem [thread:$0]  %s1, 64, %s27, [#allocation3]
    $region9: #{tpu_custom_call.1} parent=1 // pred_fallthru
      _
    // Predicated region
    $region10: #{tpu_custom_call.1} parent=1 // pred_check
      _
    $region11: #{tpu_custom_call.1} parent=1 // pred_check_branch
      %31 = sbr.rel (0) target = $region13
    $region12: #{tpu_custom_call.1} parent=1 // pred_region
      %s33 = ssub.s32 512, 512
      %34 = vsyncadd [#allocation6], %s33
      %s35 = sshll.u32 [#allocation5], 4
      %s36 = int_to_ptr.vmem [resolvable:$true] %s35
      %41 = dma.hbm_to_vmem [thread:$0]  %s2, 512, %s36, [#allocation6], 128, 128, 8
    $region13: #{tpu_custom_call.1} parent=1 // pred_fallthru
      _
    // Predicated region
    $region14: #{tpu_custom_call.1} parent=1 // pred_check
      _
    $region15: #{tpu_custom_call.1} parent=1 // pred_check_branch
      %43 = sbr.rel (0) target = $region17
    $region16: #{tpu_custom_call.1} parent=1 // pred_region
      %s45 = ssub.s32 12288, 12288
      %46 = vsyncadd [#allocation6], %s45
      %s47 = sshll.u32 [#allocation7], 4
      %s48 = int_to_ptr.vmem [resolvable:$true] %s47
      %53 = dma.hbm_to_vmem [thread:$0]  %s3, 12288, %s48, [#allocation6], 384, 384, 24
    $region17: #{tpu_custom_call.1} parent=1 // pred_fallthru
      _
    // Predicated region
    $region18: #{tpu_custom_call.1} parent=1 // pred_check
      _
    $region19: #{tpu_custom_call.1} parent=1 // pred_check_branch
      %55 = sbr.rel (0) target = $region21
    $region20: #{tpu_custom_call.1} parent=1 // pred_region
      %s57 = ssub.s32 2048, 2048
      %58 = vsyncadd [#allocation9], %s57
      %s59 = sshll.u32 [#allocation8], 4
      %s60 = int_to_ptr.vmem [resolvable:$true] %s59
      %65 = dma.hbm_to_vmem [thread:$0]  %s4, 2048, %s60, [#allocation9], 128, 128, 8
    $region21: #{tpu_custom_call.1} parent=1 // pred_fallthru
      _
    // Predicated region
    $region22: #{tpu_custom_call.1} parent=1 // pred_check
      _
    $region23: #{tpu_custom_call.1} parent=1 // pred_check_branch
      %67 = sbr.rel (0) target = $region25
    $region24: #{tpu_custom_call.1} parent=1 // pred_region
      %s69 = ssub.s32 192, 192
      %70 = vsyncadd [#allocation9], %s69
      %s72 = sshll.u32 [#allocation10], 4
      %s73 = int_to_ptr.vmem [resolvable:$true] %s72
      %75 = dma.hbm_to_vmem [thread:$0]  %s5, 192, %s73, [#allocation9]
    $region25: #{tpu_custom_call.1} parent=1 // pred_fallthru
      _
    // Predicated region
    $region26: #{tpu_custom_call.1} parent=1 // pred_check
      _
    $region27: #{tpu_custom_call.1} parent=1 // pred_check_branch
      %77 = sbr.rel (0) target = $region29
    $region28: #{tpu_custom_call.1} parent=1 // pred_region
      %78 = dma.done [#allocation3], 64
    $region29: #{tpu_custom_call.1} parent=1 // pred_fallthru
      _
    // Predicated region
    $region30: #{tpu_custom_call.1} parent=1 // pred_check
      _
    $region31: #{tpu_custom_call.1} parent=1 // pred_check_branch
      %80 = sbr.rel (0) target = $region33
    $region32: #{tpu_custom_call.1} parent=1 // pred_region
      %81 = dma.done [#allocation6], 512
    $region33: #{tpu_custom_call.1} parent=1 // pred_fallthru
      _
    // Predicated region
    $region34: #{tpu_custom_call.1} parent=1 // pred_check
      _
    $region35: #{tpu_custom_call.1} parent=1 // pred_check_branch
      %83 = sbr.rel (0) target = $region37
    $region36: #{tpu_custom_call.1} parent=1 // pred_region
      %84 = dma.done [#allocation6], 12288
    $region37: #{tpu_custom_call.1} parent=1 // pred_fallthru
      _
    // Predicated region
    $region38: #{tpu_custom_call.1} parent=1 // pred_check
      _
    $region39: #{tpu_custom_call.1} parent=1 // pred_check_branch
      %86 = sbr.rel (0) target = $region41
    $region40: #{tpu_custom_call.1} parent=1 // pred_region
      %87 = dma.done [#allocation9], 2048
    $region41: #{tpu_custom_call.1} parent=1 // pred_fallthru
      _
    // Predicated region
    $region42: #{tpu_custom_call.1} parent=1 // pred_check
      _
    $region43: #{tpu_custom_call.1} parent=1 // pred_check_branch
      %89 = sbr.rel (0) target = $region45
    $region44: #{tpu_custom_call.1} parent=1 // pred_region
      %90 = dma.done [#allocation9], 192
    $region45: #{tpu_custom_call.1} parent=1 // pred_fallthru
      _
    %p91 = scmp.eq.s32.totalorder 0, 0
    // Predicated region
    $region46: #{tpu_custom_call.1} parent=1 // pred_check
      %p92 = pneg %p91
    $region47: #{tpu_custom_call.1} parent=1 // pred_check_branch
      %94 = sbr.rel (%p92) target = $region49
    $region48: #{tpu_custom_call.1} parent=1 // pred_region
      %v95 = vld [vmem:[#allocation2] sm:$0xf]
      %96 = vst [vmem:[#allocation12] sm:$0xf] %v95
    $region49: #{tpu_custom_call.1} parent=1 // pred_fallthru
      _
    %v97 = vld [vmem:[#allocation10] sm:$0x1]
    %s98 = scalar_lea.vmem [#allocation10], 1
    %v99 = vld [vmem:[%s98] ss:$4 sm:$0x7]
    %s100 = scalar_lea.vmem [#allocation10], 2
    %v101 = vld [vmem:[%s100] ss:$4 sm:$0x7]
    %v102 = vld [vmem:[#allocation10 + $0x3] sm:$0x1]
    %v103 = vld [vmem:[%s0] sm:$0xf]
    %v104 = vld [vmem:[#allocation12] sm:$0xf]
    %v105 = vld [vmem:[#allocation5] sm:$0xff]
    %v106 = vld [vmem:[#allocation5 + $0x8] sm:$0xff]
    %v107 = vld [vmem:[#allocation5 + $0x10] sm:$0xff]
    %v108 = vld [vmem:[#allocation5 + $0x18] sm:$0xff]
    %v109 = vlaneseq
    %v110 = vshrl.u32 %v109, 7
    %v111 = vsub.s32 0, %v110
    %v112 = vrot.slane %v97, %v111
    %vm113 = vcmask 261120
    %v115 = vsel %vm113, %v103, 0
    %117 = vmatprep.subr.mxu0 0.0
    %118 = vmatpush1.msra.mxu0 0.0
    %119 = vmatprep.subr.mxu0 0.0
    %120 = vmatpush1.msra.mxu0 0.0
    %121 = vmatprep.subr.mxu0 0.0
    %122 = vmatpush1.msra.mxu0 0.0
    %123 = vmatprep.subr.mxu0 0.0
    %124 = vmatpush1.msra.mxu0 0.0
    %125 = vmatprep.subr.mxu0 0.0
    %126 = vmatpush1.msra.mxu0 0.0
    %127 = vmatprep.subr.mxu0 0.0
    %128 = vmatpush1.msra.mxu0 0.0
    %129 = vmatprep.subr.mxu0 0.0
    %130 = vmatpush1.msra.mxu0 0.0
    %131 = vmatprep.subr.mxu0 0.0
    %132 = vmatpush1.msra.mxu0 0.0
    %133 = vmatprep.subr.mxu0 0.0
    %134 = vmatpush1.msra.mxu0 0.0
    %135 = vmatprep.subr.mxu0 0.0
    %136 = vmatpush1.msra.mxu0 0.0
    %137 = vmatprep.subr.mxu0 0.0
    %138 = vmatpush1.msra.mxu0 0.0
    %139 = vmatprep.subr.mxu0 0.0
    %140 = vmatpush1.msra.mxu0 0.0
    %141 = vmatprep.subr.mxu0 0.0
    %142 = vmatpush1.msra.mxu0 %v108
    %143 = vmatprep.subr.mxu0 0.0
    %144 = vmatpush1.msra.mxu0 %v107
    %145 = vmatprep.subr.mxu0 0.0
    %146 = vmatpush1.msra.mxu0 %v106
    %147 = vmatprep.subr.mxu0 0.0
    %148 = vmatpush1.msra.mxu0 %v105
    %149 = vmatprep.subr.mxu0 0.0
    %150 = vmatpush2.msra.mxu0 0.0
    %151 = vmatprep.subr.mxu0 0.0
    %152 = vmatpush2.msra.mxu0 0.0
    %153 = vmatprep.subr.mxu0 0.0
    %154 = vmatpush2.msra.mxu0 0.0
    %155 = vmatprep.subr.mxu0 0.0
    %156 = vmatpush2.msra.mxu0 0.0
    %157 = vmatprep.subr.mxu0 0.0
    %158 = vmatpush2.msra.mxu0 0.0
    %159 = vmatprep.subr.mxu0 0.0
    %160 = vmatpush2.msra.mxu0 0.0
    %161 = vmatprep.subr.mxu0 0.0
    %162 = vmatpush2.msra.mxu0 0.0
    %163 = vmatprep.subr.mxu0 0.0
    %164 = vmatpush2.msra.mxu0 0.0
    %165 = vmatprep.subr.mxu0 0.0
    %166 = vmatpush2.msra.mxu0 0.0
    %167 = vmatprep.subr.mxu0 0.0
    %168 = vmatpush2.msra.mxu0 0.0
    %169 = vmatprep.subr.mxu0 0.0
    %170 = vmatpush2.msra.mxu0 0.0
    %171 = vmatprep.subr.mxu0 0.0
    %172 = vmatpush2.msra.mxu0 0.0
    %173 = vmatprep.subr.mxu0 0.0
    %174 = vmatpush2.msra.mxu0 0.0
    %175 = vmatprep.subr.mxu0 0.0
    %176 = vmatpush2.msra.mxu0 0.0
    %177 = vmatprep.subr.mxu0 0.0
    %178 = vmatpush2.msra.mxu0 0.0
    %179 = vmatprep.subr.mxu0 0.0
    %180 = vmatpush2.msra.mxu0 0.0
    %181 = vmatprep.mubr.f32.mxu0 0.0
    %182 = vmatmul.mubr.f32.gmra.mxu0 %v115
    %v183 = vpop.f32.mrf.mxu0
    %v184 = vadd.f32 %v112, %v183
    %v185 = vpop.f32.mrf.mxu0
    %186 = vdwg.mxu0
    %v187 = vmax.f32 %v184, 0.0
    %v188 = vld [vmem:[#allocation7] sm:$0xff]
    %v189 = vld [vmem:[#allocation7 + $0x8] sm:$0xff]
    %v190 = vld [vmem:[#allocation7 + $0x10] sm:$0xff]
    %v191 = vld [vmem:[#allocation7 + $0x18] sm:$0xff]
    %v192 = vld [vmem:[#allocation7 + $0x20] sm:$0xff]
    %v193 = vld [vmem:[#allocation7 + $0x28] sm:$0xff]
    %v194 = vld [vmem:[#allocation7 + $0x30] sm:$0xff]
    %v195 = vld [vmem:[#allocation7 + $0x38] sm:$0xff]
    %v196 = vld [vmem:[#allocation7 + $0x40] sm:$0xff]
    %v197 = vld [vmem:[#allocation7 + $0x48] sm:$0xff]
    %v198 = vld [vmem:[#allocation7 + $0x50] sm:$0xff]
    %v199 = vld [vmem:[#allocation7 + $0x58] sm:$0xff]
    %v200 = vld [vmem:[#allocation7 + $0x60] sm:$0xff]
    %v201 = vld [vmem:[#allocation7 + $0x68] sm:$0xff]
    %v202 = vld [vmem:[#allocation7 + $0x70] sm:$0xff]
    %v203 = vld [vmem:[#allocation7 + $0x78] sm:$0xff]
    %v204 = vld [vmem:[#allocation7 + $0x80] sm:$0xff]
    %v205 = vld [vmem:[#allocation7 + $0x88] sm:$0xff]
    %v206 = vld [vmem:[#allocation7 + $0x90] sm:$0xff]
    %v207 = vld [vmem:[#allocation7 + $0x98] sm:$0xff]
    %v208 = vld [vmem:[#allocation7 + $0xa0] sm:$0xff]
    %v209 = vld [vmem:[#allocation7 + $0xa8] sm:$0xff]
    %v210 = vld [vmem:[#allocation7 + $0xb0] sm:$0xff]
    %v211 = vld [vmem:[#allocation7 + $0xb8] sm:$0xff]
    %v212 = vld [vmem:[#allocation7 + $0xc0] sm:$0xff]
    %v213 = vld [vmem:[#allocation7 + $0xc8] sm:$0xff]
    %v214 = vld [vmem:[#allocation7 + $0xd0] sm:$0xff]
    %v215 = vld [vmem:[#allocation7 + $0xd8] sm:$0xff]
    %v216 = vld [vmem:[#allocation7 + $0xe0] sm:$0xff]
    %v217 = vld [vmem:[#allocation7 + $0xe8] sm:$0xff]
    %v218 = vld [vmem:[#allocation7 + $0xf0] sm:$0xff]
    %v219 = vld [vmem:[#allocation7 + $0xf8] sm:$0xff]
    %v220 = vld [vmem:[#allocation7 + $0x100] sm:$0xff]
    %v221 = vld [vmem:[#allocation7 + $0x108] sm:$0xff]
    %v222 = vld [vmem:[#allocation7 + $0x110] sm:$0xff]
    %v223 = vld [vmem:[#allocation7 + $0x118] sm:$0xff]
    %v224 = vld [vmem:[#allocation7 + $0x120] sm:$0xff]
    %v225 = vld [vmem:[#allocation7 + $0x128] sm:$0xff]
    %v226 = vld [vmem:[#allocation7 + $0x130] sm:$0xff]
    %v227 = vld [vmem:[#allocation7 + $0x138] sm:$0xff]
    %v228 = vld [vmem:[#allocation7 + $0x140] sm:$0xff]
    %v229 = vld [vmem:[#allocation7 + $0x148] sm:$0xff]
    %v230 = vld [vmem:[#allocation7 + $0x150] sm:$0xff]
    %v231 = vld [vmem:[#allocation7 + $0x158] sm:$0xff]
    %v232 = vld [vmem:[#allocation7 + $0x160] sm:$0xff]
    %v233 = vld [vmem:[#allocation7 + $0x168] sm:$0xff]
    %v234 = vld [vmem:[#allocation7 + $0x170] sm:$0xff]
    %v235 = vld [vmem:[#allocation7 + $0x178] sm:$0xff]
    %v237 = vlaneseq
    %v238 = vshrl.u32 %v237, 7
    %v239 = vsub.s32 0, %v238
    %v240 = vrot.slane %v99, %v239
    %v241 = vlaneseq
    %v242 = vshrl.u32 %v241, 7
    %v243 = vsub.s32 1, %v242
    %v244 = vrot.slane %v99, %v243
    %v245 = vlaneseq
    %v246 = vshrl.u32 %v245, 7
    %v247 = vsub.s32 2, %v246
    %v248 = vrot.slane %v99, %v247
    %252 = vmatprep.subr.mxu0 %v234
    %253 = vmatpush1.msra.mxu0 %v233
    %254 = vmatprep.subr.mxu0 %v231
    %255 = vmatpush1.msra.mxu0 %v230
    %256 = vmatprep.subr.mxu0 %v228
    %257 = vmatpush1.msra.mxu0 %v227
    %258 = vmatprep.subr.mxu0 %v225
    %259 = vmatpush1.msra.mxu0 %v224
    %260 = vmatprep.subr.mxu0 %v222
    %261 = vmatpush1.msra.mxu0 %v221
    %262 = vmatprep.subr.mxu0 %v219
    %263 = vmatpush1.msra.mxu0 %v218
    %264 = vmatprep.subr.mxu0 %v216
    %265 = vmatpush1.msra.mxu0 %v215
    %266 = vmatprep.subr.mxu0 %v213
    %267 = vmatpush1.msra.mxu0 %v212
    %268 = vmatprep.subr.mxu0 %v210
    %269 = vmatpush1.msra.mxu0 %v209
    %270 = vmatprep.subr.mxu0 %v207
    %271 = vmatpush1.msra.mxu0 %v206
    %272 = vmatprep.subr.mxu0 %v204
    %273 = vmatpush1.msra.mxu0 %v203
    %274 = vmatprep.subr.mxu0 %v201
    %275 = vmatpush1.msra.mxu0 %v200
    %276 = vmatprep.subr.mxu0 %v198
    %277 = vmatpush1.msra.mxu0 %v197
    %278 = vmatprep.subr.mxu0 %v195
    %279 = vmatpush1.msra.mxu0 %v194
    %280 = vmatprep.subr.mxu0 %v192
    %281 = vmatpush1.msra.mxu0 %v191
    %282 = vmatprep.subr.mxu0 %v189
    %283 = vmatpush1.msra.mxu0 %v188
    %284 = vmatprep.subr.mxu0 0.0
    %285 = vmatpush2.msra.mxu0 0.0
    %286 = vmatprep.subr.mxu0 0.0
    %287 = vmatpush2.msra.mxu0 0.0
    %288 = vmatprep.subr.mxu0 0.0
    %289 = vmatpush2.msra.mxu0 0.0
    %290 = vmatprep.subr.mxu0 0.0
    %291 = vmatpush2.msra.mxu0 0.0
    %292 = vmatprep.subr.mxu0 0.0
    %293 = vmatpush2.msra.mxu0 0.0
    %294 = vmatprep.subr.mxu0 0.0
    %295 = vmatpush2.msra.mxu0 0.0
    %296 = vmatprep.subr.mxu0 0.0
    %297 = vmatpush2.msra.mxu0 0.0
    %298 = vmatprep.subr.mxu0 0.0
    %299 = vmatpush2.msra.mxu0 0.0
    %300 = vmatprep.subr.mxu0 0.0
    %301 = vmatpush2.msra.mxu0 0.0
    %302 = vmatprep.subr.mxu0 0.0
    %303 = vmatpush2.msra.mxu0 0.0
    %304 = vmatprep.subr.mxu0 0.0
    %305 = vmatpush2.msra.mxu0 0.0
    %306 = vmatprep.subr.mxu0 0.0
    %307 = vmatpush2.msra.mxu0 0.0
    %308 = vmatprep.subr.mxu0 0.0
    %309 = vmatpush2.msra.mxu0 0.0
    %310 = vmatprep.subr.mxu0 0.0
    %311 = vmatpush2.msra.mxu0 0.0
    %312 = vmatprep.subr.mxu0 0.0
    %313 = vmatpush2.msra.mxu0 0.0
    %314 = vmatprep.subr.mxu0 0.0
    %315 = vmatpush2.msra.mxu0 0.0
    %316 = vmatprep.mubr.f32.mxu0 0.0
    %317 = vmatmul.mubr.f32.gmra.mxu0 %v187
    %v318 = vpop.f32.mrf.mxu0
    %v319 = vadd.f32 %v240, %v318
    %v320 = vpop.f32.mrf.mxu0
    %v321 = vadd.f32 %v244, %v320
    %322 = vdwg.mxu0
    %323 = vmatprep.subr.mxu0 0.0
    %324 = vmatpush1.msra.mxu0 %v235
    %325 = vmatprep.subr.mxu0 0.0
    %326 = vmatpush1.msra.mxu0 %v232
    %327 = vmatprep.subr.mxu0 0.0
    %328 = vmatpush1.msra.mxu0 %v229
    %329 = vmatprep.subr.mxu0 0.0
    %330 = vmatpush1.msra.mxu0 %v226
    %331 = vmatprep.subr.mxu0 0.0
    %332 = vmatpush1.msra.mxu0 %v223
    %333 = vmatprep.subr.mxu0 0.0
    %334 = vmatpush1.msra.mxu0 %v220
    %335 = vmatprep.subr.mxu0 0.0
    %336 = vmatpush1.msra.mxu0 %v217
    %337 = vmatprep.subr.mxu0 0.0
    %338 = vmatpush1.msra.mxu0 %v214
    %339 = vmatprep.subr.mxu0 0.0
    %340 = vmatpush1.msra.mxu0 %v211
    %341 = vmatprep.subr.mxu0 0.0
    %342 = vmatpush1.msra.mxu0 %v208
    %343 = vmatprep.subr.mxu0 0.0
    %344 = vmatpush1.msra.mxu0 %v205
    %345 = vmatprep.subr.mxu0 0.0
    %346 = vmatpush1.msra.mxu0 %v202
    %347 = vmatprep.subr.mxu0 0.0
    %348 = vmatpush1.msra.mxu0 %v199
    %349 = vmatprep.subr.mxu0 0.0
    %350 = vmatpush1.msra.mxu0 %v196
    %351 = vmatprep.subr.mxu0 0.0
    %352 = vmatpush1.msra.mxu0 %v193
    %353 = vmatprep.subr.mxu0 0.0
    %354 = vmatpush1.msra.mxu0 %v190
    %355 = vmatprep.subr.mxu0 0.0
    %356 = vmatpush2.msra.mxu0 0.0
    %357 = vmatprep.subr.mxu0 0.0
    %358 = vmatpush2.msra.mxu0 0.0
    %359 = vmatprep.subr.mxu0 0.0
    %360 = vmatpush2.msra.mxu0 0.0
    %361 = vmatprep.subr.mxu0 0.0
    %362 = vmatpush2.msra.mxu0 0.0
    %363 = vmatprep.subr.mxu0 0.0
    %364 = vmatpush2.msra.mxu0 0.0
    %365 = vmatprep.subr.mxu0 0.0
    %366 = vmatpush2.msra.mxu0 0.0
    %367 = vmatprep.subr.mxu0 0.0
    %368 = vmatpush2.msra.mxu0 0.0
    %369 = vmatprep.subr.mxu0 0.0
    %370 = vmatpush2.msra.mxu0 0.0
    %371 = vmatprep.subr.mxu0 0.0
    %372 = vmatpush2.msra.mxu0 0.0
    %373 = vmatprep.subr.mxu0 0.0
    %374 = vmatpush2.msra.mxu0 0.0
    %375 = vmatprep.subr.mxu0 0.0
    %376 = vmatpush2.msra.mxu0 0.0
    %377 = vmatprep.subr.mxu0 0.0
    %378 = vmatpush2.msra.mxu0 0.0
    %379 = vmatprep.subr.mxu0 0.0
    %380 = vmatpush2.msra.mxu0 0.0
    %381 = vmatprep.subr.mxu0 0.0
    %382 = vmatpush2.msra.mxu0 0.0
    %383 = vmatprep.subr.mxu0 0.0
    %384 = vmatpush2.msra.mxu0 0.0
    %385 = vmatprep.subr.mxu0 0.0
    %386 = vmatpush2.msra.mxu0 0.0
    %387 = vmatprep.mubr.f32.mxu0 0.0
    %388 = vmatmul.mubr.f32.gmra.mxu0 %v187
    %v389 = vpop.f32.mrf.mxu0
    %v390 = vadd.f32 %v248, %v389
    %v391 = vpop.f32.mrf.mxu0
    %392 = vdwg.mxu0
    %s393 = scalar_lea.vmem [#allocation7], 384
    %v394 = vld [vmem:[%s393] sm:$0xff]
    %v395 = vld [vmem:[%s393 + $0x8] sm:$0xff]
    %v396 = vld [vmem:[%s393 + $0x10] sm:$0xff]
    %v397 = vld [vmem:[%s393 + $0x18] sm:$0xff]
    %v398 = vld [vmem:[%s393 + $0x20] sm:$0xff]
    %v399 = vld [vmem:[%s393 + $0x28] sm:$0xff]
    %v400 = vld [vmem:[%s393 + $0x30] sm:$0xff]
    %v401 = vld [vmem:[%s393 + $0x38] sm:$0xff]
    %v402 = vld [vmem:[%s393 + $0x40] sm:$0xff]
    %v403 = vld [vmem:[%s393 + $0x48] sm:$0xff]
    %v404 = vld [vmem:[%s393 + $0x50] sm:$0xff]
    %v405 = vld [vmem:[%s393 + $0x58] sm:$0xff]
    %v406 = vld [vmem:[%s393 + $0x60] sm:$0xff]
    %v407 = vld [vmem:[%s393 + $0x68] sm:$0xff]
    %v408 = vld [vmem:[%s393 + $0x70] sm:$0xff]
    %v409 = vld [vmem:[%s393 + $0x78] sm:$0xff]
    %v410 = vld [vmem:[%s393 + $0x80] sm:$0xff]
    %v411 = vld [vmem:[%s393 + $0x88] sm:$0xff]
    %v412 = vld [vmem:[%s393 + $0x90] sm:$0xff]
    %v413 = vld [vmem:[%s393 + $0x98] sm:$0xff]
    %v414 = vld [vmem:[%s393 + $0xa0] sm:$0xff]
    %v415 = vld [vmem:[%s393 + $0xa8] sm:$0xff]
    %v416 = vld [vmem:[%s393 + $0xb0] sm:$0xff]
    %v417 = vld [vmem:[%s393 + $0xb8] sm:$0xff]
    %v418 = vld [vmem:[%s393 + $0xc0] sm:$0xff]
    %v419 = vld [vmem:[%s393 + $0xc8] sm:$0xff]
    %v420 = vld [vmem:[%s393 + $0xd0] sm:$0xff]
    %v421 = vld [vmem:[%s393 + $0xd8] sm:$0xff]
    %v422 = vld [vmem:[%s393 + $0xe0] sm:$0xff]
    %v423 = vld [vmem:[%s393 + $0xe8] sm:$0xff]
    %v424 = vld [vmem:[%s393 + $0xf0] sm:$0xff]
    %v425 = vld [vmem:[%s393 + $0xf8] sm:$0xff]
    %v426 = vld [vmem:[%s393 + $0x100] sm:$0xff]
    %v427 = vld [vmem:[%s393 + $0x108] sm:$0xff]
    %v428 = vld [vmem:[%s393 + $0x110] sm:$0xff]
    %v429 = vld [vmem:[%s393 + $0x118] sm:$0xff]
    %v430 = vld [vmem:[%s393 + $0x120] sm:$0xff]
    %v431 = vld [vmem:[%s393 + $0x128] sm:$0xff]
    %v432 = vld [vmem:[%s393 + $0x130] sm:$0xff]
    %v433 = vld [vmem:[%s393 + $0x138] sm:$0xff]
    %v434 = vld [vmem:[%s393 + $0x140] sm:$0xff]
    %v435 = vld [vmem:[%s393 + $0x148] sm:$0xff]
    %v436 = vld [vmem:[%s393 + $0x150] sm:$0xff]
    %v437 = vld [vmem:[%s393 + $0x158] sm:$0xff]
    %v438 = vld [vmem:[%s393 + $0x160] sm:$0xff]
    %v439 = vld [vmem:[%s393 + $0x168] sm:$0xff]
    %v440 = vld [vmem:[%s393 + $0x170] sm:$0xff]
    %v441 = vld [vmem:[%s393 + $0x178] sm:$0xff]
    %v443 = vlaneseq
    %v444 = vshrl.u32 %v443, 7
    %v445 = vsub.s32 0, %v444
    %v446 = vrot.slane %v101, %v445
    %v447 = vlaneseq
    %v448 = vshrl.u32 %v447, 7
    %v449 = vsub.s32 1, %v448
    %v450 = vrot.slane %v101, %v449
    %v451 = vlaneseq
    %v452 = vshrl.u32 %v451, 7
    %v453 = vsub.s32 2, %v452
    %v454 = vrot.slane %v101, %v453
    %458 = vmatprep.subr.mxu0 %v440
    %459 = vmatpush1.msra.mxu0 %v439
    %460 = vmatprep.subr.mxu0 %v437
    %461 = vmatpush1.msra.mxu0 %v436
    %462 = vmatprep.subr.mxu0 %v434
    %463 = vmatpush1.msra.mxu0 %v433
    %464 = vmatprep.subr.mxu0 %v431
    %465 = vmatpush1.msra.mxu0 %v430
    %466 = vmatprep.subr.mxu0 %v428
    %467 = vmatpush1.msra.mxu0 %v427
    %468 = vmatprep.subr.mxu0 %v425
    %469 = vmatpush1.msra.mxu0 %v424
    %470 = vmatprep.subr.mxu0 %v422
    %471 = vmatpush1.msra.mxu0 %v421
    %472 = vmatprep.subr.mxu0 %v419
    %473 = vmatpush1.msra.mxu0 %v418
    %474 = vmatprep.subr.mxu0 %v416
    %475 = vmatpush1.msra.mxu0 %v415
    %476 = vmatprep.subr.mxu0 %v413
    %477 = vmatpush1.msra.mxu0 %v412
    %478 = vmatprep.subr.mxu0 %v410
    %479 = vmatpush1.msra.mxu0 %v409
    %480 = vmatprep.subr.mxu0 %v407
    %481 = vmatpush1.msra.mxu0 %v406
    %482 = vmatprep.subr.mxu0 %v404
    %483 = vmatpush1.msra.mxu0 %v403
    %484 = vmatprep.subr.mxu0 %v401
    %485 = vmatpush1.msra.mxu0 %v400
    %486 = vmatprep.subr.mxu0 %v398
    %487 = vmatpush1.msra.mxu0 %v397
    %488 = vmatprep.subr.mxu0 %v395
    %489 = vmatpush1.msra.mxu0 %v394
    %490 = vmatprep.subr.mxu0 0.0
    %491 = vmatpush2.msra.mxu0 0.0
    %492 = vmatprep.subr.mxu0 0.0
    %493 = vmatpush2.msra.mxu0 0.0
    %494 = vmatprep.subr.mxu0 0.0
    %495 = vmatpush2.msra.mxu0 0.0
    %496 = vmatprep.subr.mxu0 0.0
    %497 = vmatpush2.msra.mxu0 0.0
    %498 = vmatprep.subr.mxu0 0.0
    %499 = vmatpush2.msra.mxu0 0.0
    %500 = vmatprep.subr.mxu0 0.0
    %501 = vmatpush2.msra.mxu0 0.0
    %502 = vmatprep.subr.mxu0 0.0
    %503 = vmatpush2.msra.mxu0 0.0
    %504 = vmatprep.subr.mxu0 0.0
    %505 = vmatpush2.msra.mxu0 0.0
    %506 = vmatprep.subr.mxu0 0.0
    %507 = vmatpush2.msra.mxu0 0.0
    %508 = vmatprep.subr.mxu0 0.0
    %509 = vmatpush2.msra.mxu0 0.0
    %510 = vmatprep.subr.mxu0 0.0
    %511 = vmatpush2.msra.mxu0 0.0
    %512 = vmatprep.subr.mxu0 0.0
    %513 = vmatpush2.msra.mxu0 0.0
    %514 = vmatprep.subr.mxu0 0.0
    %515 = vmatpush2.msra.mxu0 0.0
    %516 = vmatprep.subr.mxu0 0.0
    %517 = vmatpush2.msra.mxu0 0.0
    %518 = vmatprep.subr.mxu0 0.0
    %519 = vmatpush2.msra.mxu0 0.0
    %520 = vmatprep.subr.mxu0 0.0
    %521 = vmatpush2.msra.mxu0 0.0
    %522 = vmatprep.mubr.f32.mxu0 0.0
    %523 = vmatmul.mubr.f32.gmra.mxu0 %v104
    %v524 = vpop.f32.mrf.mxu0
    %v525 = vadd.f32 %v446, %v524
    %v526 = vpop.f32.mrf.mxu0
    %v527 = vadd.f32 %v450, %v526
    %528 = vdwg.mxu0
    %529 = vmatprep.subr.mxu0 0.0
    %530 = vmatpush1.msra.mxu0 %v441
    %531 = vmatprep.subr.mxu0 0.0
    %532 = vmatpush1.msra.mxu0 %v438
    %533 = vmatprep.subr.mxu0 0.0
    %534 = vmatpush1.msra.mxu0 %v435
    %535 = vmatprep.subr.mxu0 0.0
    %536 = vmatpush1.msra.mxu0 %v432
    %537 = vmatprep.subr.mxu0 0.0
    %538 = vmatpush1.msra.mxu0 %v429
    %539 = vmatprep.subr.mxu0 0.0
    %540 = vmatpush1.msra.mxu0 %v426
    %541 = vmatprep.subr.mxu0 0.0
    %542 = vmatpush1.msra.mxu0 %v423
    %543 = vmatprep.subr.mxu0 0.0
    %544 = vmatpush1.msra.mxu0 %v420
    %545 = vmatprep.subr.mxu0 0.0
    %546 = vmatpush1.msra.mxu0 %v417
    %547 = vmatprep.subr.mxu0 0.0
    %548 = vmatpush1.msra.mxu0 %v414
    %549 = vmatprep.subr.mxu0 0.0
    %550 = vmatpush1.msra.mxu0 %v411
    %551 = vmatprep.subr.mxu0 0.0
    %552 = vmatpush1.msra.mxu0 %v408
    %553 = vmatprep.subr.mxu0 0.0
    %554 = vmatpush1.msra.mxu0 %v405
    %555 = vmatprep.subr.mxu0 0.0
    %556 = vmatpush1.msra.mxu0 %v402
    %557 = vmatprep.subr.mxu0 0.0
    %558 = vmatpush1.msra.mxu0 %v399
    %559 = vmatprep.subr.mxu0 0.0
    %560 = vmatpush1.msra.mxu0 %v396
    %561 = vmatprep.subr.mxu0 0.0
    %562 = vmatpush2.msra.mxu0 0.0
    %563 = vmatprep.subr.mxu0 0.0
    %564 = vmatpush2.msra.mxu0 0.0
    %565 = vmatprep.subr.mxu0 0.0
    %566 = vmatpush2.msra.mxu0 0.0
    %567 = vmatprep.subr.mxu0 0.0
    %568 = vmatpush2.msra.mxu0 0.0
    %569 = vmatprep.subr.mxu0 0.0
    %570 = vmatpush2.msra.mxu0 0.0
    %571 = vmatprep.subr.mxu0 0.0
    %572 = vmatpush2.msra.mxu0 0.0
    %573 = vmatprep.subr.mxu0 0.0
    %574 = vmatpush2.msra.mxu0 0.0
    %575 = vmatprep.subr.mxu0 0.0
    %576 = vmatpush2.msra.mxu0 0.0
    %577 = vmatprep.subr.mxu0 0.0
    %578 = vmatpush2.msra.mxu0 0.0
    %579 = vmatprep.subr.mxu0 0.0
    %580 = vmatpush2.msra.mxu0 0.0
    %581 = vmatprep.subr.mxu0 0.0
    %582 = vmatpush2.msra.mxu0 0.0
    %583 = vmatprep.subr.mxu0 0.0
    %584 = vmatpush2.msra.mxu0 0.0
    %585 = vmatprep.subr.mxu0 0.0
    %586 = vmatpush2.msra.mxu0 0.0
    %587 = vmatprep.subr.mxu0 0.0
    %588 = vmatpush2.msra.mxu0 0.0
    %589 = vmatprep.subr.mxu0 0.0
    %590 = vmatpush2.msra.mxu0 0.0
    %591 = vmatprep.subr.mxu0 0.0
    %592 = vmatpush2.msra.mxu0 0.0
    %593 = vmatprep.mubr.f32.mxu0 0.0
    %594 = vmatmul.mubr.f32.gmra.mxu0 %v104
    %v595 = vpop.f32.mrf.mxu0
    %v596 = vadd.f32 %v454, %v595
    %v597 = vpop.f32.mrf.mxu0
    %598 = vdwg.mxu0
    %v599 = vadd.f32 %v319, %v525
    %v600 = vxor.u32 %v599, 2147483648
    %v601 = vmul.f32 %v600, 1.442695
    %v602 = vpow.pop %v601
    %v603 = vadd.f32 %v602, 1.0
    %v604 = vrcp.pop %v603
    %v605 = vmul.f32 1.0, %v604
    %v606 = vadd.f32 %v321, %v527
    %v607 = vxor.u32 %v606, 2147483648
    %v608 = vmul.f32 %v607, 1.442695
    %v609 = vpow.pop %v608
    %v610 = vadd.f32 %v609, 1.0
    %v611 = vrcp.pop %v610
    %v612 = vmul.f32 1.0, %v611
    %v613 = vmul.f32 %v605, %v596
    %v614 = vadd.f32 %v390, %v613
    %v615 = vtanh.pop %v614
    %v616 = vsub.f32 1.0, %v612
    %v617 = vmul.f32 %v616, %v615
    %v618 = vmul.f32 %v612, %v104
    %v619 = vadd.f32 %v617, %v618
    %v620 = vld [vmem:[#allocation8] sm:$0xff]
    %v621 = vld [vmem:[#allocation8 + $0x8] sm:$0xff]
    %v622 = vld [vmem:[#allocation8 + $0x10] sm:$0xff]
    %v623 = vld [vmem:[#allocation8 + $0x18] sm:$0xff]
    %v624 = vld [vmem:[#allocation8 + $0x20] sm:$0xff]
    %v625 = vld [vmem:[#allocation8 + $0x28] sm:$0xff]
    %v626 = vld [vmem:[#allocation8 + $0x30] sm:$0xff]
    %v627 = vld [vmem:[#allocation8 + $0x38] sm:$0xff]
    %v628 = vld [vmem:[#allocation8 + $0x40] sm:$0xff]
    %v629 = vld [vmem:[#allocation8 + $0x48] sm:$0xff]
    %v630 = vld [vmem:[#allocation8 + $0x50] sm:$0xff]
    %v631 = vld [vmem:[#allocation8 + $0x58] sm:$0xff]
    %v632 = vld [vmem:[#allocation8 + $0x60] sm:$0xff]
    %v633 = vld [vmem:[#allocation8 + $0x68] sm:$0xff]
    %v634 = vld [vmem:[#allocation8 + $0x70] sm:$0xff]
    %v635 = vld [vmem:[#allocation8 + $0x78] sm:$0xff]
    %v636 = vlaneseq
    %v637 = vshrl.u32 %v636, 7
    %v638 = vsub.s32 0, %v637
    %v639 = vrot.slane %v102, %v638
    %640 = vmatprep.subr.mxu0 0.0
    %641 = vmatpush1.msra.mxu0 %v635
    %642 = vmatprep.subr.mxu0 0.0
    %643 = vmatpush1.msra.mxu0 %v634
    %644 = vmatprep.subr.mxu0 0.0
    %645 = vmatpush1.msra.mxu0 %v633
    %646 = vmatprep.subr.mxu0 0.0
    %647 = vmatpush1.msra.mxu0 %v632
    %648 = vmatprep.subr.mxu0 0.0
    %649 = vmatpush1.msra.mxu0 %v631
    %650 = vmatprep.subr.mxu0 0.0
    %651 = vmatpush1.msra.mxu0 %v630
    %652 = vmatprep.subr.mxu0 0.0
    %653 = vmatpush1.msra.mxu0 %v629
    %654 = vmatprep.subr.mxu0 0.0
    %655 = vmatpush1.msra.mxu0 %v628
    %656 = vmatprep.subr.mxu0 0.0
    %657 = vmatpush1.msra.mxu0 %v627
    %658 = vmatprep.subr.mxu0 0.0
    %659 = vmatpush1.msra.mxu0 %v626
    %660 = vmatprep.subr.mxu0 0.0
    %661 = vmatpush1.msra.mxu0 %v625
    %662 = vmatprep.subr.mxu0 0.0
    %663 = vmatpush1.msra.mxu0 %v624
    %664 = vmatprep.subr.mxu0 0.0
    %665 = vmatpush1.msra.mxu0 %v623
    %666 = vmatprep.subr.mxu0 0.0
    %667 = vmatpush1.msra.mxu0 %v622
    %668 = vmatprep.subr.mxu0 0.0
    %669 = vmatpush1.msra.mxu0 %v621
    %670 = vmatprep.subr.mxu0 0.0
    %671 = vmatpush1.msra.mxu0 %v620
    %672 = vmatprep.subr.mxu0 0.0
    %673 = vmatpush2.msra.mxu0 0.0
    %674 = vmatprep.subr.mxu0 0.0
    %675 = vmatpush2.msra.mxu0 0.0
    %676 = vmatprep.subr.mxu0 0.0
    %677 = vmatpush2.msra.mxu0 0.0
    %678 = vmatprep.subr.mxu0 0.0
    %679 = vmatpush2.msra.mxu0 0.0
    %680 = vmatprep.subr.mxu0 0.0
    %681 = vmatpush2.msra.mxu0 0.0
    %682 = vmatprep.subr.mxu0 0.0
    %683 = vmatpush2.msra.mxu0 0.0
    %684 = vmatprep.subr.mxu0 0.0
    %685 = vmatpush2.msra.mxu0 0.0
    %686 = vmatprep.subr.mxu0 0.0
    %687 = vmatpush2.msra.mxu0 0.0
    %688 = vmatprep.subr.mxu0 0.0
    %689 = vmatpush2.msra.mxu0 0.0
    %690 = vmatprep.subr.mxu0 0.0
    %691 = vmatpush2.msra.mxu0 0.0
    %692 = vmatprep.subr.mxu0 0.0
    %693 = vmatpush2.msra.mxu0 0.0
    %694 = vmatprep.subr.mxu0 0.0
    %695 = vmatpush2.msra.mxu0 0.0
    %696 = vmatprep.subr.mxu0 0.0
    %697 = vmatpush2.msra.mxu0 0.0
    %698 = vmatprep.subr.mxu0 0.0
    %699 = vmatpush2.msra.mxu0 0.0
    %700 = vmatprep.subr.mxu0 0.0
    %701 = vmatpush2.msra.mxu0 0.0
    %702 = vmatprep.subr.mxu0 0.0
    %703 = vmatpush2.msra.mxu0 0.0
    %704 = vmatprep.mubr.f32.mxu0 0.0
    %705 = vmatmul.mubr.f32.gmra.mxu0 %v619
    %v706 = vpop.f32.mrf.mxu0
    %v707 = vadd.f32 %v639, %v706
    %v708 = vpop.f32.mrf.mxu0
    %709 = vdwg.mxu0
    %710 = vst [vmem:[#allocation11] sm:$0xf] %v707
    %711 = vst [vmem:[#allocation12] sm:$0xf] %v619
    // Predicated region
    $region50: #{tpu_custom_call.1} parent=1 // pred_check
      _
    $region51: #{tpu_custom_call.1} parent=1 // pred_check_branch
      %713 = sbr.rel (0) target = $region53
    $region52: #{tpu_custom_call.1} parent=1 // pred_region
      %s715 = ssub.s32 64, 64
      %716 = vsyncadd [#allocation4], %s715
      %s718 = sshll.u32 [#allocation11], 4
      %s719 = int_to_ptr.vmem [resolvable:$true] %s718
      %721 = dma.vmem_to_hbm [thread:$0]  %s719, 64, %s6, [#allocation4]
    $region53: #{tpu_custom_call.1} parent=1 // pred_fallthru
      _
    // Predicated region
    $region54: #{tpu_custom_call.1} parent=1 // pred_check
      _
    $region55: #{tpu_custom_call.1} parent=1 // pred_check_branch
      %723 = sbr.rel (0) target = $region57
    $region56: #{tpu_custom_call.1} parent=1 // pred_region
      %s725 = ssub.s32 64, 64
      %726 = vsyncadd [#allocation13], %s725
      %s728 = sshll.u32 [#allocation12], 4
      %s729 = int_to_ptr.vmem [resolvable:$true] %s728
      %731 = dma.vmem_to_hbm [thread:$0]  %s729, 64, %s7, [#allocation13]
    $region57: #{tpu_custom_call.1} parent=1 // pred_fallthru
      _
    // Predicated region
    $region58: #{tpu_custom_call.1} parent=1 // pred_check
      _
    $region59: #{tpu_custom_call.1} parent=1 // pred_check_branch
      %733 = sbr.rel (0) target = $region61
    $region60: #{tpu_custom_call.1} parent=1 // pred_region
      %734 = dma.done [#allocation4], 64
    $region61: #{tpu_custom_call.1} parent=1 // pred_fallthru
      _
    // Predicated region
    $region62: #{tpu_custom_call.1} parent=1 // pred_check
      _
    $region63: #{tpu_custom_call.1} parent=1 // pred_check_branch
      %736 = sbr.rel (0) target = $region65
    $region64: #{tpu_custom_call.1} parent=1 // pred_region
      %737 = dma.done [#allocation13], 64
    $region65: #{tpu_custom_call.1} parent=1 // pred_fallthru
      _
    %738 = vsyncpa [#allocation3], 1
    %739 = vsyncpa [#allocation6], 1
    %740 = vsyncpa [#allocation9], 1
    %741 = vsyncpa [#allocation4], 1
    %742 = vsyncpa [#allocation13], 1

</llo_original>
